<compile_context>
chip_gen: v7x
topology: tpu7x:2x2x1
jax: 0.10.0
libtpu: 0.0.40
codegen_flags: <defaults>
</compile_context>

<pallas_src>
import math

import jax
import jax.numpy as jnp
from jax.experimental import pallas as pl
from jax.experimental.pallas import tpu as pltpu

EPS = 1e-5            # PyTorch BatchNorm1d default eps
LANE = 128
SUBLANE = 8
HALO = 128            # covers conv kernels with K - 1 <= 128
VMEM_LIMIT = 32 * 1024 * 1024   # safe headroom on v7x (64 MiB/TC) and v5e/v6e


def _round_up(x, m):
    return (x + m - 1) // m * m


# ----------------------- parameter construction (glue, plain JAX) -----------------------

def calculate_mask_index(kernel_length_now, largest_kernel_length):
    right = math.ceil((largest_kernel_length - 1) / 2) - math.ceil((kernel_length_now - 1) / 2)
    left = largest_kernel_length - kernel_length_now - right
    return left, left + kernel_length_now


def build_masked_conv_params(layer_parameters, key):
    """Mimics `creak_layer_mask`: per-sub-conv weights zero-embedded into the largest
    kernel length, plus 0/1 masks and biases, concatenated over output channels."""
    K = layer_parameters[-1][-1]
    masks, weights, biases = [], [], []
    for (cin, cout, k) in layer_parameters:
        key, wk, bk = jax.random.split(key, 3)
        l, r = calculate_mask_index(k, K)
        bound = 1.0 / math.sqrt(cin * k)          # PyTorch Conv1d default init bound
        w_small = jax.random.uniform(wk, (cout, cin, k), jnp.float32, -bound, bound)
        big = jnp.zeros((cout, cin, K), jnp.float32).at[:, :, l:r].set(w_small)
        b = jax.random.uniform(bk, (cout,), jnp.float32, -bound, bound)
        m = jnp.zeros((cout, cin, K), jnp.float32).at[:, :, l:r].set(1.0)
        masks.append(m)
        weights.append(big)
        biases.append(b)
    return (jnp.concatenate(masks, axis=0),
            jnp.concatenate(weights, axis=0),
            jnp.concatenate(biases, axis=0))


# --------------------------------------- Pallas kernels ----------------------------------------

def _conv_tile(x_ref, w_ref, b_ref, col_ref, K, C_pad, TL):
    """One conv tile via im2col: assemble K shifted slices into a (K*C_pad, TL) bf16
    VMEM scratch, then a single deep MXU matmul (O_pad, K*C_pad) x (K*C_pad, TL)."""
    j = pl.program_id(1)
    start = pl.multiple_of(j * TL, LANE)                  # lane-aligned dynamic window base
    window = x_ref[:, pl.ds(start, TL + HALO)]            # (C_pad, TL + HALO) bf16
    # TODO(synk): for very large C_pad, assemble col_ref from per-tap ref slices / manual DMA
    # instead of one live window value to bound vreg pressure.
    for k in range(K):                                    # small static unroll (K <= ~16)
        col_ref[pl.ds(k * C_pad, C_pad), :] = window[:, k:k + TL]
    conv = jnp.dot(w_ref[...], col_ref[...], preferred_element_type=jnp.float32)
    return conv + b_ref[...]                              # (O_pad, TL) f32, conv bias added


def make_stats_kernel(K, C_pad, TL, L, L_pad):
    """Pass 1: per-tile BN partial sum / sum-of-squares only (conv never hits HBM)."""
    needs_mask = (L_pad != L)

    def kernel(x_ref, w_ref, b_ref, sum_ref, sumsq_ref, col_ref):
        # x_ref: (C_pad, Lbig) bf16 (resident across all L tiles of sample n)
        # w_ref: (O_pad, K*C_pad) bf16 (resident), b_ref: (O_pad, 1) f32
        # sum_ref / sumsq_ref: (O_pad, 1) f32 outputs; col_ref: (K*C_pad, TL) bf16 scratch
        conv = _conv_tile(x_ref, w_ref, b_ref, col_ref, K, C_pad, TL)

        def unmasked():
            sum_ref[...] = jnp.sum(conv, axis=1, keepdims=True)
            sumsq_ref[...] = jnp.sum(conv * conv, axis=1, keepdims=True)

        if not needs_mask:
            unmasked()
        else:
            j = pl.program_id(1)
            last = pl.num_programs(1) - 1

            @pl.when(j != last)
            def _():
                unmasked()

            @pl.when(j == last)        # lane-mask only the ragged final tile
            def _():
                lane = jax.lax.broadcasted_iota(jnp.int32, conv.shape, 1)
                valid = (lane + j * TL) < L
                cm = jnp.where(valid, conv, 0.0)
                sum_ref[...] = jnp.sum(cm, axis=1, keepdims=True)
                sumsq_ref[...] = jnp.sum(cm * cm, axis=1, keepdims=True)

    return kernel


def make_bn_relu_kernel(K, C_pad, TL):
    """Pass 2: recompute the conv tile, apply BN affine + ReLU, write output directly."""
    def kernel(x_ref, w_ref, b_ref, scale_ref, shift_ref, o_ref, col_ref):
        conv = _conv_tile(x_ref, w_ref, b_ref, col_ref, K, C_pad, TL)
        y = conv * scale_ref[...] + shift_ref[...]
        o_ref[...] = jnp.maximum(y, 0.0)
    return kernel


# --------------------------------------- forward wrapper ----------------------------------------

def build_layer_forward(x, weight, mask, bias, gamma, beta):
    N, C, L = x.shape
    O, _, K = weight.shape
    assert K - 1 <= HALO, "largest kernel length must be <= 129"

    if L >= 1024:
        TL = 1024
    elif L >= 512:
        TL = 512
    else:
        TL = _round_up(max(L, 1), LANE)
    L_pad = _round_up(L, TL)
    n_tiles = L_pad // TL
    C_pad = _round_up(C, SUBLANE)
    O_pad = _round_up(O, SUBLANE)
    KC = K * C_pad
    Lbig = L_pad + HALO
    pad_left = (K - 1) // 2                                   # nn.ConstantPad1d((left, right), 0)

    # Fold the static 0/1 mask into the weight and pack as (O_pad, K*C_pad) bf16 so one
    # deep MXU matmul against the im2col tile computes all K taps at once.
    wm = weight * mask                                        # (O, C, K)
    w2 = jnp.transpose(wm, (0, 2, 1))                         # (O, K, C)
    w2 = jnp.pad(w2, ((0, O_pad - O), (0, 0), (0, C_pad - C)))
    w2 = w2.reshape(O_pad, KC).astype(jnp.bfloat16)

    # Padded input: channel pad to C_pad, spatial = [left zeros | data | zeros to Lbig].
    xb = jnp.zeros((N, C_pad, Lbig), jnp.bfloat16)
    xb = xb.at[:, :C, pad_left:pad_left + L].set(x.astype(jnp.bfloat16))

    b2 = jnp.pad(bias, (0, O_pad - O)).reshape(O_pad, 1).astype(jnp.float32)

    grid = (N, n_tiles)
    x_spec = pl.BlockSpec((None, C_pad, Lbig), lambda n, j: (n, 0, 0))   # sample resident over j
    w_spec = pl.BlockSpec((O_pad, KC), lambda n, j: (0, 0))              # packed weights resident
    vec_spec = pl.BlockSpec((O_pad, 1), lambda n, j: (0, 0))

    # -------- pass 1: BN partial statistics only (tiny outputs, no conv writeback) --------
    psum, psumsq = pl.pallas_call(
        make_stats_kernel(K, C_pad, TL, L, L_pad),
        out_shape=(
            jax.ShapeDtypeStruct((N, n_tiles, O_pad, 1), jnp.float32),
            jax.ShapeDtypeStruct((N, n_tiles, O_pad, 1), jnp.float32),
        ),
        grid=grid,
        in_specs=[x_spec, w_spec, vec_spec],
        out_specs=(
            pl.BlockSpec((None, None, O_pad, 1), lambda n, j: (n, j, 0, 0)),
            pl.BlockSpec((None, None, O_pad, 1), lambda n, j: (n, j, 0, 0)),
        ),
        scratch_shapes=[pltpu.VMEM((KC, TL), jnp.bfloat16)],
        compiler_params=pltpu.CompilerParams(
            dimension_semantics=("parallel", "parallel"),
            vmem_limit_bytes=VMEM_LIMIT),
    )(xb, w2, b2)

    # Global BN statistics (training mode, biased variance) from f32 partials (tiny reduce).
    cnt = jnp.float32(N * L)
    s = jnp.sum(psum, axis=(0, 1, 3))                          # (O_pad,)
    ss = jnp.sum(psumsq, axis=(0, 1, 3))
    mean = s / cnt
    var = jnp.maximum(ss / cnt - mean * mean, 0.0)
    inv = jax.lax.rsqrt(var + EPS)
    g = jnp.pad(gamma, (0, O_pad - O))
    be = jnp.pad(beta, (0, O_pad - O))
    scale = (g * inv).reshape(O_pad, 1).astype(jnp.float32)
    shift = (be - mean * g * inv).reshape(O_pad, 1).astype(jnp.float32)

    # -------- pass 2: recompute conv tile, fuse BN affine + ReLU, write (N, O, L) directly ----
    out = pl.pallas_call(
        make_bn_relu_kernel(K, C_pad, TL),
        out_shape=jax.ShapeDtypeStruct((N, O, L), jnp.float32),
        grid=grid,
        in_specs=[x_spec, w_spec, vec_spec, vec_spec, vec_spec],
        out_specs=pl.BlockSpec((None, O_pad, TL), lambda n, j: (n, 0, j)),  # ragged edges masked
        scratch_shapes=[pltpu.VMEM((KC, TL), jnp.bfloat16)],
        compiler_params=pltpu.CompilerParams(
            dimension_semantics=("parallel", "parallel"),
            vmem_limit_bytes=VMEM_LIMIT),
    )(xb, w2, b2, scale, shift)

    return out


# -------------------------------- pure-JAX reference (for check) -------------------------------
# Mirrors the kernel's numerics: bf16 conv operands with f32 accumulation, f32 BN/ReLU.

def reference_forward(x, weight, mask, bias, gamma, beta):
    N, C, L = x.shape
    O, _, K = weight.shape
    xp = jnp.pad(x, ((0, 0), (0, 0), ((K - 1) // 2, K // 2))).astype(jnp.bfloat16)
    w = (weight * mask).astype(jnp.bfloat16)
    acc = jnp.zeros((N, O, L), jnp.float32)
    for k in range(K):
        acc = acc + jnp.einsum('oc,ncl->nol', w[:, :, k], xp[:, :, k:k + L],
                               preferred_element_type=jnp.float32)
    acc = acc + bias.reshape(1, O, 1)
    mean = jnp.mean(acc, axis=(0, 2), keepdims=True)
    var = jnp.mean((acc - mean) ** 2, axis=(0, 2), keepdims=True)
    y = (acc - mean) * jax.lax.rsqrt(var + EPS)
    y = y * gamma.reshape(1, O, 1) + beta.reshape(1, O, 1)
    return jnp.maximum(y, 0.0)


if __name__ == "__main__":
    # Small analogue of one entry of generate_layer_parameter_list:
    # tuples of (in_channels, out_channels, prime kernel_size), ascending kernel sizes.
    layer_parameters = [(4, 3, 1), (4, 3, 2), (4, 3, 3), (4, 3, 5)]

    key = jax.random.PRNGKey(0)
    key, xk, pk = jax.random.split(key, 3)

    N, C, L = 2, 4, 16
    x = jax.random.normal(xk, (N, C, L), jnp.float32)

    mask, weight, bias = build_masked_conv_params(layer_parameters, pk)
    O = weight.shape[0]
    gamma = jnp.ones((O,), jnp.float32)     # BatchNorm1d default affine init
    beta = jnp.zeros((O,), jnp.float32)

    fwd = jax.jit(build_layer_forward)
    out = jax.block_until_ready(fwd(x, weight, mask, bias, gamma, beta))

    ref = reference_forward(x, weight, mask, bias, gamma, beta)
    assert out.shape == (N, O, L)
    assert bool(jnp.allclose(out, ref, rtol=1e-2, atol=1e-2)), "mismatch vs reference"
    print("KERNEL_OK")
</pallas_src>

<mosaic_0001>
module attributes {stable_mosaic.version = 11 : i64} {
  func.func @kernel(%arg0: i32, %arg1: i32, %arg2: memref<1x8x256xbf16, #tpu.memory_space<vmem>>, %arg3: memref<16x40xbf16, #tpu.memory_space<vmem>>, %arg4: memref<16x1xf32, #tpu.memory_space<vmem>>, %arg5: memref<16x1xf32, #tpu.memory_space<vmem>>, %arg6: memref<16x1xf32, #tpu.memory_space<vmem>>, %arg7: memref<1x16x128xf32, #tpu.memory_space<vmem>>, %arg8: memref<40x128xbf16, #tpu.memory_space<vmem>>) attributes {dimension_semantics = [#tpu.dimension_semantics<parallel>, #tpu.dimension_semantics<parallel>], iteration_bounds = array<i64: 2, 1>, scalar_prefetch = 0 : i64, scratch_operands = 1 : i64, tpu.core_type = #tpu.core_type<tc>, window_params = [{transform_indices = @transform_0, window_bounds = array<i64: 1, 8, 256>}, {pipeline_mode = #tpu.pipeline_mode<synchronous>, transform_indices = @transform_1, window_bounds = array<i64: 16, 40>}, {pipeline_mode = #tpu.pipeline_mode<synchronous>, transform_indices = @transform_2, window_bounds = array<i64: 16, 1>}, {pipeline_mode = #tpu.pipeline_mode<synchronous>, transform_indices = @transform_3, window_bounds = array<i64: 16, 1>}, {pipeline_mode = #tpu.pipeline_mode<synchronous>, transform_indices = @transform_4, window_bounds = array<i64: 16, 1>}, {transform_indices = @transform_5, window_bounds = array<i64: 1, 16, 128>}]} {
    %c128_i32 = arith.constant 128 : i32
    %0 = arith.muli %arg1, %c128_i32 : i32
    %1 = tpu.assume_multiple %0, 128 : i32
    %c0 = arith.constant 0 : index
    %c0_0 = arith.constant 0 : index
    %2 = arith.index_cast %1 : i32 to index
    %3 = vector.load %arg2[%c0, %c0_0, %2] : memref<1x8x256xbf16, #tpu.memory_space<vmem>>, vector<1x8x256xbf16>
    %4 = vector.shape_cast %3 : vector<1x8x256xbf16> to vector<8x256xbf16>
    %5 = vector.extract_strided_slice %4 {offsets = [0, 0], sizes = [8, 128], strides = [1, 1]} : vector<8x256xbf16> to vector<8x128xbf16>
    %c0_1 = arith.constant 0 : index
    %c0_2 = arith.constant 0 : index
    %6 = vector.load %arg8[%c0_1, %c0_2] : memref<40x128xbf16, #tpu.memory_space<vmem>>, vector<8x128xbf16>
    tpu.vector_store %arg8[%c0_1, %c0_2], %5 {strides = array<i32>} : memref<40x128xbf16, #tpu.memory_space<vmem>>, vector<8x128xbf16>,
    %7 = vector.extract_strided_slice %4 {offsets = [0, 1], sizes = [8, 128], strides = [1, 1]} : vector<8x256xbf16> to vector<8x128xbf16>
    %c8 = arith.constant 8 : index
    %c0_3 = arith.constant 0 : index
    %8 = vector.load %arg8[%c8, %c0_3] : memref<40x128xbf16, #tpu.memory_space<vmem>>, vector<8x128xbf16>
    tpu.vector_store %arg8[%c8, %c0_3], %7 {strides = array<i32>} : memref<40x128xbf16, #tpu.memory_space<vmem>>, vector<8x128xbf16>,
    %9 = vector.extract_strided_slice %4 {offsets = [0, 2], sizes = [8, 128], strides = [1, 1]} : vector<8x256xbf16> to vector<8x128xbf16>
    %c16 = arith.constant 16 : index
    %c0_4 = arith.constant 0 : index
    %10 = vector.load %arg8[%c16, %c0_4] : memref<40x128xbf16, #tpu.memory_space<vmem>>, vector<8x128xbf16>
    tpu.vector_store %arg8[%c16, %c0_4], %9 {strides = array<i32>} : memref<40x128xbf16, #tpu.memory_space<vmem>>, vector<8x128xbf16>,
    %11 = vector.extract_strided_slice %4 {offsets = [0, 3], sizes = [8, 128], strides = [1, 1]} : vector<8x256xbf16> to vector<8x128xbf16>
    %c24 = arith.constant 24 : index
    %c0_5 = arith.constant 0 : index
    %12 = vector.load %arg8[%c24, %c0_5] : memref<40x128xbf16, #tpu.memory_space<vmem>>, vector<8x128xbf16>
    tpu.vector_store %arg8[%c24, %c0_5], %11 {strides = array<i32>} : memref<40x128xbf16, #tpu.memory_space<vmem>>, vector<8x128xbf16>,
    %13 = vector.extract_strided_slice %4 {offsets = [0, 4], sizes = [8, 128], strides = [1, 1]} : vector<8x256xbf16> to vector<8x128xbf16>
    %c32 = arith.constant 32 : index
    %c0_6 = arith.constant 0 : index
    %14 = vector.load %arg8[%c32, %c0_6] : memref<40x128xbf16, #tpu.memory_space<vmem>>, vector<8x128xbf16>
    tpu.vector_store %arg8[%c32, %c0_6], %13 {strides = array<i32>} : memref<40x128xbf16, #tpu.memory_space<vmem>>, vector<8x128xbf16>,
    %c0_7 = arith.constant 0 : index
    %c0_8 = arith.constant 0 : index
    %15 = vector.load %arg3[%c0_7, %c0_8] : memref<16x40xbf16, #tpu.memory_space<vmem>>, vector<16x40xbf16>
    %c0_9 = arith.constant 0 : index
    %c0_10 = arith.constant 0 : index
    %16 = vector.load %arg8[%c0_9, %c0_10] : memref<40x128xbf16, #tpu.memory_space<vmem>>, vector<40x128xbf16>
    %cst = arith.constant dense<0.000000e+00> : vector<16x128xf32>
    %17 = tpu.matmul %15, %16, %cst {dimension_numbers = #tpu.dot_dimension_numbers<[1], [0], [0], [1], [0, 0, 1, 1], [], []>} : vector<16x40xbf16>, vector<40x128xbf16>, vector<16x128xf32> -> vector<16x128xf32>
    %c0_11 = arith.constant 0 : index
    %c0_12 = arith.constant 0 : index
    %18 = vector.load %arg4[%c0_11, %c0_12] : memref<16x1xf32, #tpu.memory_space<vmem>>, vector<16x1xf32>
    %19 = vector.broadcast %18 : vector<16x1xf32> to vector<16x128xf32>
    %20 = arith.addf %17, %19 : vector<16x128xf32>
    %c0_13 = arith.constant 0 : index
    %c0_14 = arith.constant 0 : index
    %21 = vector.load %arg5[%c0_13, %c0_14] : memref<16x1xf32, #tpu.memory_space<vmem>>, vector<16x1xf32>
    %22 = vector.broadcast %21 : vector<16x1xf32> to vector<16x128xf32>
    %23 = arith.mulf %20, %22 : vector<16x128xf32>
    %c0_15 = arith.constant 0 : index
    %c0_16 = arith.constant 0 : index
    %24 = vector.load %arg6[%c0_15, %c0_16] : memref<16x1xf32, #tpu.memory_space<vmem>>, vector<16x1xf32>
    %25 = vector.broadcast %24 : vector<16x1xf32> to vector<16x128xf32>
    %26 = arith.addf %23, %25 : vector<16x128xf32>
    %cst_17 = arith.constant 0.000000e+00 : f32
    %27 = vector.broadcast %cst_17 : f32 to vector<16x128xf32>
    %28 = arith.maximumf %26, %27 : vector<16x128xf32>
    %c0_18 = arith.constant 0 : index
    %c0_19 = arith.constant 0 : index
    %c0_20 = arith.constant 0 : index
    %29 = vector.load %arg7[%c0_18, %c0_19, %c0_20] : memref<1x16x128xf32, #tpu.memory_space<vmem>>, vector<1x16x128xf32>
    %30 = vector.shape_cast %29 : vector<1x16x128xf32> to vector<16x128xf32>
    %31 = vector.shape_cast %28 : vector<16x128xf32> to vector<1x16x128xf32>
    tpu.vector_store %arg7[%c0_18, %c0_19, %c0_20], %31 {strides = array<i32>} : memref<1x16x128xf32, #tpu.memory_space<vmem>>, vector<1x16x128xf32>,
    return
  }
  func.func @transform_0(%arg0: i32, %arg1: i32) -> (i32, i32, i32) {
    %c0_i32 = arith.constant 0 : i32
    %c0_i32_0 = arith.constant 0 : i32
    %c0_i32_1 = arith.constant 0 : i32
    return %arg0, %c0_i32, %c0_i32_0 : i32, i32, i32
  }
  func.func @transform_1(%arg0: i32, %arg1: i32) -> (i32, i32) {
    %c0_i32 = arith.constant 0 : i32
    %c0_i32_0 = arith.constant 0 : i32
    %c0_i32_1 = arith.constant 0 : i32
    return %c0_i32, %c0_i32_0 : i32, i32
  }
  func.func @transform_2(%arg0: i32, %arg1: i32) -> (i32, i32) {
    %c0_i32 = arith.constant 0 : i32
    %c0_i32_0 = arith.constant 0 : i32
    %c0_i32_1 = arith.constant 0 : i32
    return %c0_i32, %c0_i32_0 : i32, i32
  }
  func.func @transform_3(%arg0: i32, %arg1: i32) -> (i32, i32) {
    %c0_i32 = arith.constant 0 : i32
    %c0_i32_0 = arith.constant 0 : i32
    %c0_i32_1 = arith.constant 0 : i32
    return %c0_i32, %c0_i32_0 : i32, i32
  }
  func.func @transform_4(%arg0: i32, %arg1: i32) -> (i32, i32) {
    %c0_i32 = arith.constant 0 : i32
    %c0_i32_0 = arith.constant 0 : i32
    %c0_i32_1 = arith.constant 0 : i32
    return %c0_i32, %c0_i32_0 : i32, i32
  }
  func.func @transform_5(%arg0: i32, %arg1: i32) -> (i32, i32, i32) {
    %c0_i32 = arith.constant 0 : i32
    %c0_i32_0 = arith.constant 0 : i32
    return %arg0, %c0_i32, %arg1 : i32, i32, i32
  }
}

module attributes {stable_mosaic.version = 11 : i64} {
  func.func @kernel(%arg0: i32, %arg1: i32, %arg2: memref<1x8x256xbf16, #tpu.memory_space<vmem>>, %arg3: memref<16x40xbf16, #tpu.memory_space<vmem>>, %arg4: memref<16x1xf32, #tpu.memory_space<vmem>>, %arg5: memref<1x1x16x1xf32, #tpu.memory_space<vmem>>, %arg6: memref<1x1x16x1xf32, #tpu.memory_space<vmem>>, %arg7: memref<40x128xbf16, #tpu.memory_space<vmem>>) attributes {dimension_semantics = [#tpu.dimension_semantics<parallel>, #tpu.dimension_semantics<parallel>], iteration_bounds = array<i64: 2, 1>, scalar_prefetch = 0 : i64, scratch_operands = 1 : i64, tpu.core_type = #tpu.core_type<tc>, window_params = [{transform_indices = @transform_0, window_bounds = array<i64: 1, 8, 256>}, {pipeline_mode = #tpu.pipeline_mode<synchronous>, transform_indices = @transform_1, window_bounds = array<i64: 16, 40>}, {pipeline_mode = #tpu.pipeline_mode<synchronous>, transform_indices = @transform_2, window_bounds = array<i64: 16, 1>}, {transform_indices = @transform_3, window_bounds = array<i64: 1, 1, 16, 1>}, {transform_indices = @transform_4, window_bounds = array<i64: 1, 1, 16, 1>}]} {
    %c128_i32 = arith.constant 128 : i32
    %0 = arith.muli %arg1, %c128_i32 : i32
    %1 = tpu.assume_multiple %0, 128 : i32
    %c0 = arith.constant 0 : index
    %c0_0 = arith.constant 0 : index
    %2 = arith.index_cast %1 : i32 to index
    %3 = vector.load %arg2[%c0, %c0_0, %2] : memref<1x8x256xbf16, #tpu.memory_space<vmem>>, vector<1x8x256xbf16>
    %4 = vector.shape_cast %3 : vector<1x8x256xbf16> to vector<8x256xbf16>
    %5 = vector.extract_strided_slice %4 {offsets = [0, 0], sizes = [8, 128], strides = [1, 1]} : vector<8x256xbf16> to vector<8x128xbf16>
    %c0_1 = arith.constant 0 : index
    %c0_2 = arith.constant 0 : index
    %6 = vector.load %arg7[%c0_1, %c0_2] : memref<40x128xbf16, #tpu.memory_space<vmem>>, vector<8x128xbf16>
    tpu.vector_store %arg7[%c0_1, %c0_2], %5 {strides = array<i32>} : memref<40x128xbf16, #tpu.memory_space<vmem>>, vector<8x128xbf16>,
    %7 = vector.extract_strided_slice %4 {offsets = [0, 1], sizes = [8, 128], strides = [1, 1]} : vector<8x256xbf16> to vector<8x128xbf16>
    %c8 = arith.constant 8 : index
    %c0_3 = arith.constant 0 : index
    %8 = vector.load %arg7[%c8, %c0_3] : memref<40x128xbf16, #tpu.memory_space<vmem>>, vector<8x128xbf16>
    tpu.vector_store %arg7[%c8, %c0_3], %7 {strides = array<i32>} : memref<40x128xbf16, #tpu.memory_space<vmem>>, vector<8x128xbf16>,
    %9 = vector.extract_strided_slice %4 {offsets = [0, 2], sizes = [8, 128], strides = [1, 1]} : vector<8x256xbf16> to vector<8x128xbf16>
    %c16 = arith.constant 16 : index
    %c0_4 = arith.constant 0 : index
    %10 = vector.load %arg7[%c16, %c0_4] : memref<40x128xbf16, #tpu.memory_space<vmem>>, vector<8x128xbf16>
    tpu.vector_store %arg7[%c16, %c0_4], %9 {strides = array<i32>} : memref<40x128xbf16, #tpu.memory_space<vmem>>, vector<8x128xbf16>,
    %11 = vector.extract_strided_slice %4 {offsets = [0, 3], sizes = [8, 128], strides = [1, 1]} : vector<8x256xbf16> to vector<8x128xbf16>
    %c24 = arith.constant 24 : index
    %c0_5 = arith.constant 0 : index
    %12 = vector.load %arg7[%c24, %c0_5] : memref<40x128xbf16, #tpu.memory_space<vmem>>, vector<8x128xbf16>
    tpu.vector_store %arg7[%c24, %c0_5], %11 {strides = array<i32>} : memref<40x128xbf16, #tpu.memory_space<vmem>>, vector<8x128xbf16>,
    %13 = vector.extract_strided_slice %4 {offsets = [0, 4], sizes = [8, 128], strides = [1, 1]} : vector<8x256xbf16> to vector<8x128xbf16>
    %c32 = arith.constant 32 : index
    %c0_6 = arith.constant 0 : index
    %14 = vector.load %arg7[%c32, %c0_6] : memref<40x128xbf16, #tpu.memory_space<vmem>>, vector<8x128xbf16>
    tpu.vector_store %arg7[%c32, %c0_6], %13 {strides = array<i32>} : memref<40x128xbf16, #tpu.memory_space<vmem>>, vector<8x128xbf16>,
    %c0_7 = arith.constant 0 : index
    %c0_8 = arith.constant 0 : index
    %15 = vector.load %arg3[%c0_7, %c0_8] : memref<16x40xbf16, #tpu.memory_space<vmem>>, vector<16x40xbf16>
    %c0_9 = arith.constant 0 : index
    %c0_10 = arith.constant 0 : index
    %16 = vector.load %arg7[%c0_9, %c0_10] : memref<40x128xbf16, #tpu.memory_space<vmem>>, vector<40x128xbf16>
    %cst = arith.constant dense<0.000000e+00> : vector<16x128xf32>
    %17 = tpu.matmul %15, %16, %cst {dimension_numbers = #tpu.dot_dimension_numbers<[1], [0], [0], [1], [0, 0, 1, 1], [], []>} : vector<16x40xbf16>, vector<40x128xbf16>, vector<16x128xf32> -> vector<16x128xf32>
    %c0_11 = arith.constant 0 : index
    %c0_12 = arith.constant 0 : index
    %18 = vector.load %arg4[%c0_11, %c0_12] : memref<16x1xf32, #tpu.memory_space<vmem>>, vector<16x1xf32>
    %19 = vector.broadcast %18 : vector<16x1xf32> to vector<16x128xf32>
    %20 = arith.addf %17, %19 : vector<16x128xf32>
    %c0_i32 = arith.constant 0 : i32
    %21 = arith.cmpi ne, %arg1, %c0_i32 : i32
    %22 = arith.extui %21 : i1 to i32
    %c0_i32_13 = arith.constant 0 : i32
    %23 = arith.cmpi ne, %22, %c0_i32_13 : i32
    scf.if %23 {
      %cst_16 = arith.constant dense<0.000000e+00> : vector<16xf32>
      %27 = vector.multi_reduction <add>, %20, %cst_16 [1] : vector<16x128xf32> to vector<16xf32>
      %28 = vector.shape_cast %27 : vector<16xf32> to vector<16x1xf32>
      %c0_17 = arith.constant 0 : index
      %c0_18 = arith.constant 0 : index
      %c0_19 = arith.constant 0 : index
      %c0_20 = arith.constant 0 : index
      %29 = vector.load %arg5[%c0_17, %c0_18, %c0_19, %c0_20] : memref<1x1x16x1xf32, #tpu.memory_space<vmem>>, vector<1x1x16x1xf32>
      %30 = vector.shape_cast %29 : vector<1x1x16x1xf32> to vector<16x1xf32>
      %31 = vector.shape_cast %28 : vector<16x1xf32> to vector<1x1x16x1xf32>
      tpu.vector_store %arg5[%c0_17, %c0_18, %c0_19, %c0_20], %31 {strides = array<i32>} : memref<1x1x16x1xf32, #tpu.memory_space<vmem>>, vector<1x1x16x1xf32>,
      %32 = arith.mulf %20, %20 : vector<16x128xf32>
      %cst_21 = arith.constant dense<0.000000e+00> : vector<16xf32>
      %33 = vector.multi_reduction <add>, %32, %cst_21 [1] : vector<16x128xf32> to vector<16xf32>
      %34 = vector.shape_cast %33 : vector<16xf32> to vector<16x1xf32>
      %c0_22 = arith.constant 0 : index
      %c0_23 = arith.constant 0 : index
      %c0_24 = arith.constant 0 : index
      %c0_25 = arith.constant 0 : index
      %35 = vector.load %arg6[%c0_22, %c0_23, %c0_24, %c0_25] : memref<1x1x16x1xf32, #tpu.memory_space<vmem>>, vector<1x1x16x1xf32>
      %36 = vector.shape_cast %35 : vector<1x1x16x1xf32> to vector<16x1xf32>
      %37 = vector.shape_cast %34 : vector<16x1xf32> to vector<1x1x16x1xf32>
      tpu.vector_store %arg6[%c0_22, %c0_23, %c0_24, %c0_25], %37 {strides = array<i32>} : memref<1x1x16x1xf32, #tpu.memory_space<vmem>>, vector<1x1x16x1xf32>,
    } else {
    }
    %c0_i32_14 = arith.constant 0 : i32
    %24 = arith.cmpi eq, %arg1, %c0_i32_14 : i32
    %25 = arith.extui %24 : i1 to i32
    %c0_i32_15 = arith.constant 0 : i32
    %26 = arith.cmpi ne, %25, %c0_i32_15 : i32
    scf.if %26 {
      %27 = tpu.iota {dimensions = array<i32: 1>} : vector<16x128xi32>
      %c128_i32_16 = arith.constant 128 : i32
      %28 = arith.muli %arg1, %c128_i32_16 : i32
      %29 = vector.broadcast %28 : i32 to vector<16x128xi32>
      %30 = arith.addi %27, %29 : vector<16x128xi32>
      %c16_i32 = arith.constant 16 : i32
      %31 = vector.broadcast %c16_i32 : i32 to vector<16x128xi32>
      %32 = arith.cmpi slt, %30, %31 : vector<16x128xi32>
      %cst_17 = arith.constant 0.000000e+00 : f32
      %33 = vector.broadcast %cst_17 : f32 to vector<16x128xf32>
      %34 = arith.select %32, %20, %33 : vector<16x128xi1>, vector<16x128xf32>
      %cst_18 = arith.constant dense<0.000000e+00> : vector<16xf32>
      %35 = vector.multi_reduction <add>, %34, %cst_18 [1] : vector<16x128xf32> to vector<16xf32>
      %36 = vector.shape_cast %35 : vector<16xf32> to vector<16x1xf32>
      %c0_19 = arith.constant 0 : index
      %c0_20 = arith.constant 0 : index
      %c0_21 = arith.constant 0 : index
      %c0_22 = arith.constant 0 : index
      %37 = vector.load %arg5[%c0_19, %c0_20, %c0_21, %c0_22] : memref<1x1x16x1xf32, #tpu.memory_space<vmem>>, vector<1x1x16x1xf32>
      %38 = vector.shape_cast %37 : vector<1x1x16x1xf32> to vector<16x1xf32>
      %39 = vector.shape_cast %36 : vector<16x1xf32> to vector<1x1x16x1xf32>
      tpu.vector_store %arg5[%c0_19, %c0_20, %c0_21, %c0_22], %39 {strides = array<i32>} : memref<1x1x16x1xf32, #tpu.memory_space<vmem>>, vector<1x1x16x1xf32>,
      %40 = arith.mulf %34, %34 : vector<16x128xf32>
      %cst_23 = arith.constant dense<0.000000e+00> : vector<16xf32>
      %41 = vector.multi_reduction <add>, %40, %cst_23 [1] : vector<16x128xf32> to vector<16xf32>
      %42 = vector.shape_cast %41 : vector<16xf32> to vector<16x1xf32>
      %c0_24 = arith.constant 0 : index
      %c0_25 = arith.constant 0 : index
      %c0_26 = arith.constant 0 : index
      %c0_27 = arith.constant 0 : index
      %43 = vector.load %arg6[%c0_24, %c0_25, %c0_26, %c0_27] : memref<1x1x16x1xf32, #tpu.memory_space<vmem>>, vector<1x1x16x1xf32>
      %44 = vector.shape_cast %43 : vector<1x1x16x1xf32> to vector<16x1xf32>
      %45 = vector.shape_cast %42 : vector<16x1xf32> to vector<1x1x16x1xf32>
      tpu.vector_store %arg6[%c0_24, %c0_25, %c0_26, %c0_27], %45 {strides = array<i32>} : memref<1x1x16x1xf32, #tpu.memory_space<vmem>>, vector<1x1x16x1xf32>,
    } else {
    }
    return
  }
  func.func @transform_0(%arg0: i32, %arg1: i32) -> (i32, i32, i32) {
    %c0_i32 = arith.constant 0 : i32
    %c0_i32_0 = arith.constant 0 : i32
    %c0_i32_1 = arith.constant 0 : i32
    return %arg0, %c0_i32, %c0_i32_0 : i32, i32, i32
  }
  func.func @transform_1(%arg0: i32, %arg1: i32) -> (i32, i32) {
    %c0_i32 = arith.constant 0 : i32
    %c0_i32_0 = arith.constant 0 : i32
    %c0_i32_1 = arith.constant 0 : i32
    return %c0_i32, %c0_i32_0 : i32, i32
  }
  func.func @transform_2(%arg0: i32, %arg1: i32) -> (i32, i32) {
    %c0_i32 = arith.constant 0 : i32
    %c0_i32_0 = arith.constant 0 : i32
    %c0_i32_1 = arith.constant 0 : i32
    return %c0_i32, %c0_i32_0 : i32, i32
  }
  func.func @transform_3(%arg0: i32, %arg1: i32) -> (i32, i32, i32, i32) {
    %c0_i32 = arith.constant 0 : i32
    %c0_i32_0 = arith.constant 0 : i32
    %c0_i32_1 = arith.constant 0 : i32
    return %arg0, %arg1, %c0_i32, %c0_i32_0 : i32, i32, i32, i32
  }
  func.func @transform_4(%arg0: i32, %arg1: i32) -> (i32, i32, i32, i32) {
    %c0_i32 = arith.constant 0 : i32
    %c0_i32_0 = arith.constant 0 : i32
    %c0_i32_1 = arith.constant 0 : i32
    return %arg0, %arg1, %c0_i32, %c0_i32_0 : i32, i32, i32, i32
  }
}

</mosaic_0001>

<llo_original>
// kernel: build_layer_forward.2
$region0: #{build_layer_forward.2}
  #allocation0 [shape = 'u32[]', space=smem, size = 0x4, offset = 0x4, fixed_abs, tag = 'smem constant byte address 0x4 - core index']
  #allocation1 [shape = 'u32[144,128]{1,0:T(1,128)}', space=vmem, size = 0x12000, scoped, tag = 'internal scratch']
  #allocation2 [shape = 'bf16[40,128]{1,0:T(8,128)(2,1)}', space=vmem, size = 0x2800, scoped, tag = 'scratch operand']
  %s0 = inlined_call_operand.vmem [shape: bf16[2,8,256], index: 0, kind: input, shape index: {}]
  %s1 = inlined_call_operand.vmem [shape: bf16[16,40], index: 1, kind: input, shape index: {}]
  %s2 = inlined_call_operand.vmem [shape: f32[16,1], index: 2, kind: input, shape index: {}]
  %s3 = inlined_call_operand.vmem [shape: f32[2,1,16,1], index: 3, kind: output, shape index: {0}]
  %s4 = inlined_call_operand.vmem [shape: f32[2,1,16,1], index: 4, kind: output, shape index: {1}]
  %5 = xla_tuple %s3, %s4
  %s6 = sld [smem:[#allocation0]]
  $region61: #{build_layer_forward.2} parent=0
    _
  %s8 = ssub.s32 1, %s6
  %s9 = scalar_select 0, %s8, %s6
  loop: start=0, step=1, limit=4
  $region2: #{build_layer_forward.2} parent=0 // loop_pre_header
    _
  $region3: #{build_layer_forward.2} parent=0 // loop_header
    %s11 = sphi 0, %s15
    %p12 = scmp.ge.s32.totalorder %s11, 4
    %s18 = sphi 0, %s30
    %s19 = sphi 0, %s26
    %s20 = sphi 0, %s18
    %s21 = sphi 0, %s19
    %s22 = sphi 0, %s20
    %s23 = sphi 0, %s21
    %s33 = sphi 0, %s35
    %s36 = sphi 0, %s33
    %s37 = sphi 0, %s36
    %s53 = sphi 0, %s37
    %s57 = sphi 0, %s57
    %s59 = sphi 0, %s57
    %s60 = sphi 0, %s59
    %s74 = sphi 0, %s60
    %s78 = sphi 0, %s78
    %s80 = sphi 0, %s78
    %s81 = sphi 0, %s80
    %s95 = sphi 0, %s81
    %s103 = sphi 0, %s105
    %s106 = sphi 0, %s103
    %s107 = sphi 0, %s106
    %s123 = sphi 0, %s107
    %s131 = sphi 0, %s133
    %s134 = sphi 0, %s131
    %s135 = sphi 0, %s134
    %s151 = sphi 0, %s135
  $region4: #{build_layer_forward.2} parent=0 // loop_header_branch
    %14 = sbr.rel (%p12) target = $region8
  $region5: #{build_layer_forward.2} parent=0 // loop_body
    %s16 = ssub.s32 %s11, 1
    %s17 = ssub.s32 %s11, 2
    %s24 = sadd.s32 1, %s19
    %p25 = scmp.ge.s32.totalorder %s24, 1
    %s26 = scalar_select %p25, 0, %s24
    %s27 = sadd.s32 1, %s18
    %s28 = scalar_select %p25, %s27, %s18
    %p29 = scmp.ge.s32.totalorder %s28, 2
    %s30 = scalar_select %p29, 0, %s28
    %s31 = ssub.s32 %s18, %s30
    %p32 = scmp.eq.s32.totalorder %s31, 0
    %s34 = sadd.s32 %s33, 1
    %s35 = scalar_select %p32, %s33, %s34
    %p38 = pneg %p32
    %p39 = scmp.eq.s32.totalorder %s11, 1
    %p40 = por %p38, %p39
    %p41 = scmp.ne.s32.totalorder %s33, %s36
    %p42 = scmp.eq.s32.totalorder %s11, 0
    %p43 = por %p41, %p42
    %p44 = scmp.ne.s32.totalorder %s33, %s36
    %p45 = scmp.eq.s32.totalorder %s16, 1
    %p46 = por %p44, %p45
    %p47 = scmp.ne.s32.totalorder %s36, %s37
    %p48 = scmp.eq.s32.totalorder %s16, 0
    %p49 = por %p47, %p48
    %p50 = scmp.ne.s32.totalorder %s36, %s37
    %p51 = scmp.eq.s32.totalorder %s17, 1
    %p52 = por %p50, %p51
    %p54 = scmp.ne.s32.totalorder %s37, %s53
    %p55 = scmp.eq.s32.totalorder %s17, 0
    %p56 = por %p54, %p55
    %s58 = sadd.s32 %s57, 1
    %p61 = scmp.eq.s32.totalorder %s11, 1
    %p62 = scmp.ne.s32.totalorder %s57, %s59
    %p63 = scmp.eq.s32.totalorder %s11, 0
    %p64 = por %p62, %p63
    %p65 = scmp.ne.s32.totalorder %s57, %s59
    %p66 = scmp.eq.s32.totalorder %s16, 1
    %p67 = por %p65, %p66
    %p68 = scmp.ne.s32.totalorder %s59, %s60
    %p69 = scmp.eq.s32.totalorder %s16, 0
    %p70 = por %p68, %p69
    %p71 = scmp.ne.s32.totalorder %s59, %s60
    %p72 = scmp.eq.s32.totalorder %s17, 1
    %p73 = por %p71, %p72
    %p75 = scmp.ne.s32.totalorder %s60, %s74
    %p76 = scmp.eq.s32.totalorder %s17, 0
    %p77 = por %p75, %p76
    %s79 = sadd.s32 %s78, 1
    %p82 = scmp.eq.s32.totalorder %s11, 1
    %p83 = scmp.ne.s32.totalorder %s78, %s80
    %p84 = scmp.eq.s32.totalorder %s11, 0
    %p85 = por %p83, %p84
    %p86 = scmp.ne.s32.totalorder %s78, %s80
    %p87 = scmp.eq.s32.totalorder %s16, 1
    %p88 = por %p86, %p87
    %p89 = scmp.ne.s32.totalorder %s80, %s81
    %p90 = scmp.eq.s32.totalorder %s16, 0
    %p91 = por %p89, %p90
    %p92 = scmp.ne.s32.totalorder %s80, %s81
    %p93 = scmp.eq.s32.totalorder %s17, 1
    %p94 = por %p92, %p93
    %p96 = scmp.ne.s32.totalorder %s81, %s95
    %p97 = scmp.eq.s32.totalorder %s17, 0
    %p98 = por %p96, %p97
    %s99 = ssub.s32 %s18, %s30
    %s100 = ssub.s32 %s19, %s26
    %s101 = sor.u32 %s99, %s100
    %p102 = scmp.eq.s32.totalorder %s101, 0
    %s104 = sadd.s32 %s103, 1
    %s105 = scalar_select %p102, %s103, %s104
    %p108 = pneg %p102
    %p109 = scmp.eq.s32.totalorder %s11, 1
    %p110 = por %p108, %p109
    %p111 = scmp.ne.s32.totalorder %s103, %s106
    %p112 = scmp.eq.s32.totalorder %s11, 0
    %p113 = por %p111, %p112
    %p114 = scmp.ne.s32.totalorder %s103, %s106
    %p115 = scmp.eq.s32.totalorder %s16, 1
    %p116 = por %p114, %p115
    %p117 = scmp.ne.s32.totalorder %s106, %s107
    %p118 = scmp.eq.s32.totalorder %s16, 0
    %p119 = por %p117, %p118
    %p120 = scmp.ne.s32.totalorder %s106, %s107
    %p121 = scmp.eq.s32.totalorder %s17, 1
    %p122 = por %p120, %p121
    %p124 = scmp.ne.s32.totalorder %s107, %s123
    %p125 = scmp.eq.s32.totalorder %s17, 0
    %p126 = por %p124, %p125
    %s127 = ssub.s32 %s18, %s30
    %s128 = ssub.s32 %s19, %s26
    %s129 = sor.u32 %s127, %s128
    %p130 = scmp.eq.s32.totalorder %s129, 0
    %s132 = sadd.s32 %s131, 1
    %s133 = scalar_select %p130, %s131, %s132
    %p136 = pneg %p130
    %p137 = scmp.eq.s32.totalorder %s11, 1
    %p138 = por %p136, %p137
    %p139 = scmp.ne.s32.totalorder %s131, %s134
    %p140 = scmp.eq.s32.totalorder %s11, 0
    %p141 = por %p139, %p140
    %p142 = scmp.ne.s32.totalorder %s131, %s134
    %p143 = scmp.eq.s32.totalorder %s16, 1
    %p144 = por %p142, %p143
    %p145 = scmp.ne.s32.totalorder %s134, %s135
    %p146 = scmp.eq.s32.totalorder %s16, 0
    %p147 = por %p145, %p146
    %p148 = scmp.ne.s32.totalorder %s134, %s135
    %p149 = scmp.eq.s32.totalorder %s17, 1
    %p150 = por %p148, %p149
    %p152 = scmp.ne.s32.totalorder %s135, %s151
    %p153 = scmp.eq.s32.totalorder %s17, 0
    %p154 = por %p152, %p153
    %p155 = scmp.le.s32.totalorder 1, %s11
    %p156 = scmp.lt.s32.totalorder %s11, 3
    %p157 = pnand %p155, %p156
    %p158 = pneg %p157
    // Predicated region
    $region9: #{build_layer_forward.2} parent=5 // pred_check
      _
    $region10: #{build_layer_forward.2} parent=5 // pred_check_branch
      %160 = sbr.rel (%p157) target = $region12
    $region11: #{build_layer_forward.2} parent=5 // pred_region
      %s161 = ssub.s32 %s11, 1
      // Predicated region
      $region13: #{build_layer_forward.2} parent=11 // pred_check
        %p162 = pneg %p70
      $region14: #{build_layer_forward.2} parent=11 // pred_check_branch
        %164 = sbr.rel (%p162) target = $region16
      $region15: #{build_layer_forward.2} parent=11 // pred_region
        _
      $region16: #{build_layer_forward.2} parent=11 // pred_fallthru
        _
      // Predicated region
      $region17: #{build_layer_forward.2} parent=11 // pred_check
        %p165 = pneg %p91
      $region18: #{build_layer_forward.2} parent=11 // pred_check_branch
        %167 = sbr.rel (%p165) target = $region20
      $region19: #{build_layer_forward.2} parent=11 // pred_region
        _
      $region20: #{build_layer_forward.2} parent=11 // pred_fallthru
        _
    $region12: #{build_layer_forward.2} parent=5 // pred_fallthru
      _
    %p168 = scmp.lt.s32.totalorder %s11, 2
    // Predicated region
    $region21: #{build_layer_forward.2} parent=5 // pred_check
      %p169 = pneg %p168
    $region22: #{build_layer_forward.2} parent=5 // pred_check_branch
      %171 = sbr.rel (%p169) target = $region24
    $region23: #{build_layer_forward.2} parent=5 // pred_region
      // Predicated region
      $region25: #{build_layer_forward.2} parent=23 // pred_check
        %p172 = pneg %p43
      $region26: #{build_layer_forward.2} parent=23 // pred_check_branch
        %174 = sbr.rel (%p172) target = $region28
      $region27: #{build_layer_forward.2} parent=23 // pred_region
        %p175 = scmp.lt.s32.totalorder %s18, 1
        %s176 = scalar_select %p175, %s18, 1
        %s177 = smul.addr %s176, 2
        %s178 = smul.addr %s177, 4
        %s179 = scalar_lea.vmem %s0, %s178
      $region28: #{build_layer_forward.2} parent=23 // pred_fallthru
        _
    $region24: #{build_layer_forward.2} parent=5 // pred_fallthru
      _
    %p180 = scmp.le.s32.totalorder 1, %s11
    %p181 = scmp.lt.s32.totalorder %s11, 3
    %p182 = pnand %p180, %p181
    %p183 = pneg %p182
    // Predicated region
    $region29: #{build_layer_forward.2} parent=5 // pred_check
      _
    $region30: #{build_layer_forward.2} parent=5 // pred_check_branch
      %185 = sbr.rel (%p182) target = $region32
    $region31: #{build_layer_forward.2} parent=5 // pred_region
      %s186 = ssub.s32 %s11, 1
      %p187 = scmp.lt.s32.totalorder %s20, 1
      %s188 = scalar_select %p187, %s20, 1
      %s189 = smul.addr %s188, 2
      %s190 = smul.addr %s189, 4
      %s191 = scalar_lea.vmem %s0, %s190
      %p192 = pneg %p49
      %p193 = pneg %p46
      %p194 = pneg %p70
      %p195 = pneg %p67
      %p196 = pneg %p91
      %p197 = pneg %p88
      %p198 = pneg %p119
      %p199 = pneg %p116
      %p200 = scmp.lt.s32.totalorder %s20, 1
      %s201 = scalar_select %p200, %s20, 1
      %p202 = scmp.lt.s32.totalorder %s21, 0
      %s203 = scalar_select %p202, %s21, 0
      %s204 = smul.addr %s203, 2
      %s205 = smul.addr %s201, 2
      %s206 = sadd.s32 %s204, %s205
      %s207 = smul.addr %s206, 8
      %s208 = scalar_lea.vmem %s3, %s207
      %p209 = pneg %p147
      %p210 = pneg %p144
      %p211 = scmp.lt.s32.totalorder %s20, 1
      %s212 = scalar_select %p211, %s20, 1
      %p213 = scmp.lt.s32.totalorder %s21, 0
      %s214 = scalar_select %p213, %s21, 0
      %s215 = smul.addr %s214, 2
      %s216 = smul.addr %s212, 2
      %s217 = sadd.s32 %s215, %s216
      %s218 = smul.addr %s217, 8
      %s219 = scalar_lea.vmem %s4, %s218
      %p220 = scmp.lt.s32.totalorder %s20, 1
      %s221 = scalar_select %p220, %s20, 1
      %s222 = smul.addr %s221, 2
      %s223 = smul.addr %s222, 4
      %s224 = scalar_lea.vmem %s0, %s223
      %p225 = scmp.lt.s32.totalorder %s20, 1
      %s226 = scalar_select %p225, %s20, 1
      %p227 = scmp.lt.s32.totalorder %s21, 0
      %s228 = scalar_select %p227, %s21, 0
      %s229 = smul.addr %s228, 2
      %s230 = smul.addr %s226, 2
      %s231 = sadd.s32 %s229, %s230
      %s232 = smul.addr %s231, 8
      %s233 = scalar_lea.vmem %s3, %s232
      %p234 = scmp.lt.s32.totalorder %s20, 1
      %s235 = scalar_select %p234, %s20, 1
      %p236 = scmp.lt.s32.totalorder %s21, 0
      %s237 = scalar_select %p236, %s21, 0
      %s238 = smul.addr %s237, 2
      %s239 = smul.addr %s235, 2
      %s240 = sadd.s32 %s238, %s239
      %s241 = smul.addr %s240, 8
      %s242 = scalar_lea.vmem %s4, %s241
      %s244 = smul.u32 %s21, 128
      %s245 = sshra.s32 %s244, 7
      %s246 = sand.u32 %s244, 127
      %s247 = smul.addr %s245, 4
      %s248 = scalar_lea.vmem %s224, %s247
      %v249 = vld [vmem:[%s248] sm:$0xff]
      %250 = vst [vmem:[#allocation2] sm:$0xf] %v249
      %252 = vrot.lane.b32.xlu0 %v249, 127
      %v253 = vpop.permute.xlu0 %252
      %v254 = vrot.slane %v253, 4
      %vm255 = vcmask 1039360
      %v256 = vsel %vm255, %v253, %v254
      %258 = vst [vmem:[#allocation2 + $0x4] sm:$0xf] %v256
      %259 = vrot.lane.b32.xlu0 %v249, 126
      %v260 = vpop.permute.xlu0 %259
      %v261 = vrot.slane %v260, 4
      %vm262 = vcmask 1031168
      %v263 = vsel %vm262, %v260, %v261
      %265 = vst [vmem:[#allocation2 + $0x8] sm:$0xf] %v263
      %266 = vrot.lane.b32.xlu0 %v249, 125
      %v267 = vpop.permute.xlu0 %266
      %v268 = vrot.slane %v267, 4
      %vm269 = vcmask 1022976
      %v270 = vsel %vm269, %v267, %v268
      %272 = vst [vmem:[#allocation2 + $0xc] sm:$0xf] %v270
      %273 = vrot.lane.b32.xlu0 %v249, 124
      %v274 = vpop.permute.xlu0 %273
      %v275 = vrot.slane %v274, 4
      %vm276 = vcmask 1014784
      %v277 = vsel %vm276, %v274, %v275
      %279 = vst [vmem:[#allocation2 + $0x10] sm:$0xf] %v277
      %v280 = vld [vmem:[%s1] sm:$0xf]
      %v281 = vld [vmem:[%s1 + $0x4] sm:$0xf]
      %v282 = vld [vmem:[#allocation2] sm:$0xf]
      %v283 = vld [vmem:[#allocation2 + $0x4] sm:$0xf]
      %v284 = vld [vmem:[#allocation2 + $0x8] sm:$0xf]
      %v285 = vld [vmem:[#allocation2 + $0xc] sm:$0xf]
      %v286 = vld [vmem:[#allocation2 + $0x10] sm:$0xf]
      %v287 = vld [vmem:[%s2] sm:$0xff]
      %v288 = vld [vmem:[%s2 + $0x8] sm:$0xff]
      %290 = vset.pattern.permute.xlu0 0
      %291 = vperm.xlu0 %290, %v287
      %v292 = vpop.permute.xlu0 %291
      %295 = vset.pattern.permute.xlu0 0
      %296 = vperm.xlu0 %295, %v288
      %v297 = vpop.permute.xlu0 %296
      %v301 = vunpack.c.l.b16 %v280
      %v302 = vunpack.c.l.b16 %v281
      %v303 = vpack.c.b16 %v302, %v301
      %v309 = vunpack.c.l.b16 %v282
      %v310 = vunpack.c.l.b16 %v283
      %v311 = vunpack.c.l.b16 %v284
      %v312 = vunpack.c.l.b16 %v285
      %v313 = vunpack.c.l.b16 %v286
      %v314 = vpack.c.b16 %v310, %v309
      %v315 = vpack.c.b16 %v312, %v311
      %v316 = vpack.c.b16 %v313, %v313
      %vm319 = vcmask 326656
      %v321 = vsel %vm319, %v303, 0
      %vm323 = vcmask 1043456
      %v325 = vsel %vm323, %v316, 0
      %327 = vmatprep.subr.bf16.mxu0 0
      %328 = vmatpush1.bf16.msra.mxu0 %v314
      %329 = vmatprep.subr.bf16.mxu0 0
      %330 = vmatpush1.bf16.msra.mxu0 %v315
      %331 = vmatprep.subr.bf16.mxu0 0
      %332 = vmatpush1.bf16.msra.mxu0 %v325
      %333 = vmatprep.subr.bf16.mxu0 0
      %334 = vmatpush1.bf16.msra.mxu0 0
      %335 = vmatprep.subr.bf16.mxu0 0
      %336 = vmatpush1.bf16.msra.mxu0 0
      %337 = vmatprep.subr.bf16.mxu0 0
      %338 = vmatpush1.bf16.msra.mxu0 0
      %339 = vmatprep.subr.bf16.mxu0 0
      %340 = vmatpush1.bf16.msra.mxu0 0
      %341 = vmatprep.subr.bf16.mxu0 0
      %342 = vmatpush1.bf16.msra.mxu0 0
      %343 = vmatprep.subr.bf16.mxu0 0
      %344 = vmatpush1.bf16.msra.mxu0 0
      %345 = vmatprep.subr.bf16.mxu0 0
      %346 = vmatpush1.bf16.msra.mxu0 0
      %347 = vmatprep.subr.bf16.mxu0 0
      %348 = vmatpush1.bf16.msra.mxu0 0
      %349 = vmatprep.subr.bf16.mxu0 0
      %350 = vmatpush1.bf16.msra.mxu0 0
      %351 = vmatprep.subr.bf16.mxu0 0
      %352 = vmatpush1.bf16.msra.mxu0 0
      %353 = vmatprep.subr.bf16.mxu0 0
      %354 = vmatpush1.bf16.msra.mxu0 0
      %355 = vmatprep.subr.bf16.mxu0 0
      %356 = vmatpush1.bf16.msra.mxu0 0
      %357 = vmatprep.subr.bf16.mxu0 0
      %358 = vmatpush1.bf16.msra.mxu0 0
      %359 = vmatprep.mubr.bf16.mxu0 0
      %360 = vmatmul.mubr.bf16.gmra.mrb[0].mxu0 %v321
      %v361 = vpop.f32.mrb[0].mxu0
      %v362 = vadd.f32 %v292, %v361
      %v363 = vpop.f32.mrb[0].mxu0
      %v364 = vpop.f32.mrb[0].mxu0
      %v365 = vadd.f32 %v297, %v364
      %v366 = vpop.f32.mrb[0].mxu0
      %367 = vdwg.mxu0
      %p368 = scmp.ne.s32.totalorder %s21, 0
      // Predicated region
      $region33: #{build_layer_forward.2} parent=31 // pred_check
        %p369 = pneg %p368
      $region34: #{build_layer_forward.2} parent=31 // pred_check_branch
        %371 = sbr.rel (%p369) target = $region36
      $region35: #{build_layer_forward.2} parent=31 // pred_region
        %372 = vadd.xlane.f32.xlu0 %v362
        %v373 = vpop.xlane.xlu0 %372
        %374 = vadd.xlane.f32.xlu0 %v365
        %v375 = vpop.xlane.xlu0 %374
        %vm376 = vcmask 7168
        %377 = vst.msk [vmem:[%s233] sm:$0xff] %vm376, %v373
        %378 = vst.msk [vmem:[%s233 + $0x8] sm:$0xff] %vm376, %v375
        %v379 = vmul.f32 %v362, %v362
        %v380 = vmul.f32 %v365, %v365
        %381 = vadd.xlane.f32.xlu0 %v379
        %v382 = vpop.xlane.xlu0 %381
        %383 = vadd.xlane.f32.xlu0 %v380
        %v384 = vpop.xlane.xlu0 %383
        %385 = vst.msk [vmem:[%s242] sm:$0xff] %vm376, %v382
        %386 = vst.msk [vmem:[%s242 + $0x8] sm:$0xff] %vm376, %v384
      $region36: #{build_layer_forward.2} parent=31 // pred_fallthru
        _
      %p387 = scmp.eq.s32.totalorder %s21, 0
      // Predicated region
      $region37: #{build_layer_forward.2} parent=31 // pred_check
        %p388 = pneg %p387
      $region38: #{build_layer_forward.2} parent=31 // pred_check_branch
        %390 = sbr.rel (%p388) target = $region40
      $region39: #{build_layer_forward.2} parent=31 // pred_region
        %v391 = vlaneseq
        %v392 = vand.u32 %v391, 127
        %v393 = vstv %s244
        %v394 = vadd.s32 %v392, %v393
        %vm395 = vcmp.lt.s32.totalorder %v394, 16
        %v396 = vsel %vm395, %v362, 0.0
        %v397 = vsel %vm395, %v365, 0.0
        %398 = vadd.xlane.f32.xlu0 %v396
        %v399 = vpop.xlane.xlu0 %398
        %400 = vadd.xlane.f32.xlu0 %v397
        %v401 = vpop.xlane.xlu0 %400
        %vm402 = vcmask 7168
        %403 = vst.msk [vmem:[%s233] sm:$0xff] %vm402, %v399
        %404 = vst.msk [vmem:[%s233 + $0x8] sm:$0xff] %vm402, %v401
        %v405 = vmul.f32 %v396, %v396
        %v406 = vmul.f32 %v397, %v397
        %407 = vadd.xlane.f32.xlu0 %v405
        %v408 = vpop.xlane.xlu0 %407
        %409 = vadd.xlane.f32.xlu0 %v406
        %v410 = vpop.xlane.xlu0 %409
        %411 = vst.msk [vmem:[%s242] sm:$0xff] %vm402, %v408
        %412 = vst.msk [vmem:[%s242 + $0x8] sm:$0xff] %vm402, %v410
      $region40: #{build_layer_forward.2} parent=31 // pred_fallthru
        _
      %p413 = scmp.lt.s32.totalorder %s20, 1
      %s414 = scalar_select %p413, %s20, 1
      %p415 = scmp.lt.s32.totalorder %s21, 0
      %s416 = scalar_select %p415, %s21, 0
      %s417 = smul.addr %s416, 2
      %s418 = smul.addr %s414, 2
      %s419 = sadd.s32 %s417, %s418
      %s420 = smul.addr %s419, 8
      %s421 = scalar_lea.vmem %s3, %s420
      %p422 = scmp.lt.s32.totalorder %s20, 1
      %s423 = scalar_select %p422, %s20, 1
      %p424 = scmp.lt.s32.totalorder %s21, 0
      %s425 = scalar_select %p424, %s21, 0
      %s426 = smul.addr %s425, 2
      %s427 = smul.addr %s423, 2
      %s428 = sadd.s32 %s426, %s427
      %s429 = smul.addr %s428, 8
      %s430 = scalar_lea.vmem %s4, %s429
      // Predicated region
      $region41: #{build_layer_forward.2} parent=31 // pred_check
        %p431 = pneg %p116
      $region42: #{build_layer_forward.2} parent=31 // pred_check_branch
        %433 = sbr.rel (%p431) target = $region44
      $region43: #{build_layer_forward.2} parent=31 // pred_region
        _
      $region44: #{build_layer_forward.2} parent=31 // pred_fallthru
        _
      // Predicated region
      $region45: #{build_layer_forward.2} parent=31 // pred_check
        %p434 = pneg %p144
      $region46: #{build_layer_forward.2} parent=31 // pred_check_branch
        %436 = sbr.rel (%p434) target = $region48
      $region47: #{build_layer_forward.2} parent=31 // pred_region
        _
      $region48: #{build_layer_forward.2} parent=31 // pred_fallthru
        _
    $region32: #{build_layer_forward.2} parent=5 // pred_fallthru
      _
    %p437 = scmp.le.s32.totalorder 2, %s11
    // Predicated region
    $region49: #{build_layer_forward.2} parent=5 // pred_check
      %p438 = pneg %p437
    $region50: #{build_layer_forward.2} parent=5 // pred_check_branch
      %440 = sbr.rel (%p438) target = $region52
    $region51: #{build_layer_forward.2} parent=5 // pred_region
      %s441 = ssub.s32 %s11, 2
      // Predicated region
      $region53: #{build_layer_forward.2} parent=51 // pred_check
        %p442 = pneg %p122
      $region54: #{build_layer_forward.2} parent=51 // pred_check_branch
        %444 = sbr.rel (%p442) target = $region56
      $region55: #{build_layer_forward.2} parent=51 // pred_region
        %p445 = scmp.lt.s32.totalorder %s22, 1
        %s446 = scalar_select %p445, %s22, 1
        %p447 = scmp.lt.s32.totalorder %s23, 0
        %s448 = scalar_select %p447, %s23, 0
        %s449 = smul.addr %s448, 2
        %s450 = smul.addr %s446, 2
        %s451 = sadd.s32 %s449, %s450
        %s452 = smul.addr %s451, 8
        %s453 = scalar_lea.vmem %s3, %s452
      $region56: #{build_layer_forward.2} parent=51 // pred_fallthru
        _
      // Predicated region
      $region57: #{build_layer_forward.2} parent=51 // pred_check
        %p454 = pneg %p150
      $region58: #{build_layer_forward.2} parent=51 // pred_check_branch
        %456 = sbr.rel (%p454) target = $region60
      $region59: #{build_layer_forward.2} parent=51 // pred_region
        %p457 = scmp.lt.s32.totalorder %s22, 1
        %s458 = scalar_select %p457, %s22, 1
        %p459 = scmp.lt.s32.totalorder %s23, 0
        %s460 = scalar_select %p459, %s23, 0
        %s461 = smul.addr %s460, 2
        %s462 = smul.addr %s458, 2
        %s463 = sadd.s32 %s461, %s462
        %s464 = smul.addr %s463, 8
        %s465 = scalar_lea.vmem %s4, %s464
      $region60: #{build_layer_forward.2} parent=51 // pred_fallthru
        _
    $region52: #{build_layer_forward.2} parent=5 // pred_fallthru
      _
  $region6: #{build_layer_forward.2} parent=0 // loop_footer
    %s15 = sadd.s32 1, %s11
  $region7: #{build_layer_forward.2} parent=0 // loop_footer_branch
    %10 = sbr.rel target = $region3
  $region8: #{build_layer_forward.2} parent=0 // loop_exit
    _

// kernel: build_layer_forward.3
$region0: #{build_layer_forward.3}
  #allocation0 [shape = 'u32[]', space=smem, size = 0x4, offset = 0x4, fixed_abs, tag = 'smem constant byte address 0x4 - core index']
  #allocation1 [shape = 'u32[144,128]{1,0:T(1,128)}', space=vmem, size = 0x12000, scoped, tag = 'internal scratch']
  #allocation2 [shape = 'bf16[40,128]{1,0:T(8,128)(2,1)}', space=vmem, size = 0x2800, scoped, tag = 'scratch operand']
  %s0 = inlined_call_operand.vmem [shape: bf16[2,8,256], index: 0, kind: input, shape index: {}]
  %s1 = inlined_call_operand.vmem [shape: bf16[16,40], index: 1, kind: input, shape index: {}]
  %s2 = inlined_call_operand.vmem [shape: f32[16,1], index: 2, kind: input, shape index: {}]
  %s3 = inlined_call_operand.vmem [shape: f32[16,1], index: 3, kind: input, shape index: {}]
  %s4 = inlined_call_operand.vmem [shape: f32[16,1], index: 4, kind: input, shape index: {}]
  %s5 = inlined_call_operand.vmem [shape: f32[2,12,16], index: 5, kind: output, shape index: {}]
  %s6 = sld [smem:[#allocation0]]
  $region53: #{build_layer_forward.3} parent=0
    _
  %s8 = ssub.s32 1, %s6
  %s9 = scalar_select 0, %s8, %s6
  loop: start=0, step=1, limit=4
  $region2: #{build_layer_forward.3} parent=0 // loop_pre_header
    _
  $region3: #{build_layer_forward.3} parent=0 // loop_header
    %s11 = sphi 0, %s15
    %p12 = scmp.ge.s32.totalorder %s11, 4
    %s18 = sphi 0, %s30
    %s19 = sphi 0, %s26
    %s20 = sphi 0, %s18
    %s21 = sphi 0, %s19
    %s22 = sphi 0, %s20
    %s23 = sphi 0, %s21
    %s33 = sphi 0, %s35
    %s36 = sphi 0, %s33
    %s37 = sphi 0, %s36
    %s53 = sphi 0, %s37
    %s57 = sphi 0, %s57
    %s59 = sphi 0, %s57
    %s60 = sphi 0, %s59
    %s74 = sphi 0, %s60
    %s78 = sphi 0, %s78
    %s80 = sphi 0, %s78
    %s81 = sphi 0, %s80
    %s95 = sphi 0, %s81
    %s99 = sphi 0, %s99
    %s101 = sphi 0, %s99
    %s102 = sphi 0, %s101
    %s116 = sphi 0, %s102
    %s120 = sphi 0, %s120
    %s122 = sphi 0, %s120
    %s123 = sphi 0, %s122
    %s137 = sphi 0, %s123
    %s145 = sphi 0, %s147
    %s148 = sphi 0, %s145
    %s149 = sphi 0, %s148
    %s165 = sphi 0, %s149
  $region4: #{build_layer_forward.3} parent=0 // loop_header_branch
    %14 = sbr.rel (%p12) target = $region8
  $region5: #{build_layer_forward.3} parent=0 // loop_body
    %s16 = ssub.s32 %s11, 1
    %s17 = ssub.s32 %s11, 2
    %s24 = sadd.s32 1, %s19
    %p25 = scmp.ge.s32.totalorder %s24, 1
    %s26 = scalar_select %p25, 0, %s24
    %s27 = sadd.s32 1, %s18
    %s28 = scalar_select %p25, %s27, %s18
    %p29 = scmp.ge.s32.totalorder %s28, 2
    %s30 = scalar_select %p29, 0, %s28
    %s31 = ssub.s32 %s18, %s30
    %p32 = scmp.eq.s32.totalorder %s31, 0
    %s34 = sadd.s32 %s33, 1
    %s35 = scalar_select %p32, %s33, %s34
    %p38 = pneg %p32
    %p39 = scmp.eq.s32.totalorder %s11, 1
    %p40 = por %p38, %p39
    %p41 = scmp.ne.s32.totalorder %s33, %s36
    %p42 = scmp.eq.s32.totalorder %s11, 0
    %p43 = por %p41, %p42
    %p44 = scmp.ne.s32.totalorder %s33, %s36
    %p45 = scmp.eq.s32.totalorder %s16, 1
    %p46 = por %p44, %p45
    %p47 = scmp.ne.s32.totalorder %s36, %s37
    %p48 = scmp.eq.s32.totalorder %s16, 0
    %p49 = por %p47, %p48
    %p50 = scmp.ne.s32.totalorder %s36, %s37
    %p51 = scmp.eq.s32.totalorder %s17, 1
    %p52 = por %p50, %p51
    %p54 = scmp.ne.s32.totalorder %s37, %s53
    %p55 = scmp.eq.s32.totalorder %s17, 0
    %p56 = por %p54, %p55
    %s58 = sadd.s32 %s57, 1
    %p61 = scmp.eq.s32.totalorder %s11, 1
    %p62 = scmp.ne.s32.totalorder %s57, %s59
    %p63 = scmp.eq.s32.totalorder %s11, 0
    %p64 = por %p62, %p63
    %p65 = scmp.ne.s32.totalorder %s57, %s59
    %p66 = scmp.eq.s32.totalorder %s16, 1
    %p67 = por %p65, %p66
    %p68 = scmp.ne.s32.totalorder %s59, %s60
    %p69 = scmp.eq.s32.totalorder %s16, 0
    %p70 = por %p68, %p69
    %p71 = scmp.ne.s32.totalorder %s59, %s60
    %p72 = scmp.eq.s32.totalorder %s17, 1
    %p73 = por %p71, %p72
    %p75 = scmp.ne.s32.totalorder %s60, %s74
    %p76 = scmp.eq.s32.totalorder %s17, 0
    %p77 = por %p75, %p76
    %s79 = sadd.s32 %s78, 1
    %p82 = scmp.eq.s32.totalorder %s11, 1
    %p83 = scmp.ne.s32.totalorder %s78, %s80
    %p84 = scmp.eq.s32.totalorder %s11, 0
    %p85 = por %p83, %p84
    %p86 = scmp.ne.s32.totalorder %s78, %s80
    %p87 = scmp.eq.s32.totalorder %s16, 1
    %p88 = por %p86, %p87
    %p89 = scmp.ne.s32.totalorder %s80, %s81
    %p90 = scmp.eq.s32.totalorder %s16, 0
    %p91 = por %p89, %p90
    %p92 = scmp.ne.s32.totalorder %s80, %s81
    %p93 = scmp.eq.s32.totalorder %s17, 1
    %p94 = por %p92, %p93
    %p96 = scmp.ne.s32.totalorder %s81, %s95
    %p97 = scmp.eq.s32.totalorder %s17, 0
    %p98 = por %p96, %p97
    %s100 = sadd.s32 %s99, 1
    %p103 = scmp.eq.s32.totalorder %s11, 1
    %p104 = scmp.ne.s32.totalorder %s99, %s101
    %p105 = scmp.eq.s32.totalorder %s11, 0
    %p106 = por %p104, %p105
    %p107 = scmp.ne.s32.totalorder %s99, %s101
    %p108 = scmp.eq.s32.totalorder %s16, 1
    %p109 = por %p107, %p108
    %p110 = scmp.ne.s32.totalorder %s101, %s102
    %p111 = scmp.eq.s32.totalorder %s16, 0
    %p112 = por %p110, %p111
    %p113 = scmp.ne.s32.totalorder %s101, %s102
    %p114 = scmp.eq.s32.totalorder %s17, 1
    %p115 = por %p113, %p114
    %p117 = scmp.ne.s32.totalorder %s102, %s116
    %p118 = scmp.eq.s32.totalorder %s17, 0
    %p119 = por %p117, %p118
    %s121 = sadd.s32 %s120, 1
    %p124 = scmp.eq.s32.totalorder %s11, 1
    %p125 = scmp.ne.s32.totalorder %s120, %s122
    %p126 = scmp.eq.s32.totalorder %s11, 0
    %p127 = por %p125, %p126
    %p128 = scmp.ne.s32.totalorder %s120, %s122
    %p129 = scmp.eq.s32.totalorder %s16, 1
    %p130 = por %p128, %p129
    %p131 = scmp.ne.s32.totalorder %s122, %s123
    %p132 = scmp.eq.s32.totalorder %s16, 0
    %p133 = por %p131, %p132
    %p134 = scmp.ne.s32.totalorder %s122, %s123
    %p135 = scmp.eq.s32.totalorder %s17, 1
    %p136 = por %p134, %p135
    %p138 = scmp.ne.s32.totalorder %s123, %s137
    %p139 = scmp.eq.s32.totalorder %s17, 0
    %p140 = por %p138, %p139
    %s141 = ssub.s32 %s18, %s30
    %s142 = ssub.s32 %s19, %s26
    %s143 = sor.u32 %s141, %s142
    %p144 = scmp.eq.s32.totalorder %s143, 0
    %s146 = sadd.s32 %s145, 1
    %s147 = scalar_select %p144, %s145, %s146
    %p150 = pneg %p144
    %p151 = scmp.eq.s32.totalorder %s11, 1
    %p152 = por %p150, %p151
    %p153 = scmp.ne.s32.totalorder %s145, %s148
    %p154 = scmp.eq.s32.totalorder %s11, 0
    %p155 = por %p153, %p154
    %p156 = scmp.ne.s32.totalorder %s145, %s148
    %p157 = scmp.eq.s32.totalorder %s16, 1
    %p158 = por %p156, %p157
    %p159 = scmp.ne.s32.totalorder %s148, %s149
    %p160 = scmp.eq.s32.totalorder %s16, 0
    %p161 = por %p159, %p160
    %p162 = scmp.ne.s32.totalorder %s148, %s149
    %p163 = scmp.eq.s32.totalorder %s17, 1
    %p164 = por %p162, %p163
    %p166 = scmp.ne.s32.totalorder %s149, %s165
    %p167 = scmp.eq.s32.totalorder %s17, 0
    %p168 = por %p166, %p167
    %p169 = scmp.le.s32.totalorder 1, %s11
    %p170 = scmp.lt.s32.totalorder %s11, 3
    %p171 = pnand %p169, %p170
    %p172 = pneg %p171
    // Predicated region
    $region9: #{build_layer_forward.3} parent=5 // pred_check
      _
    $region10: #{build_layer_forward.3} parent=5 // pred_check_branch
      %174 = sbr.rel (%p171) target = $region12
    $region11: #{build_layer_forward.3} parent=5 // pred_region
      %s175 = ssub.s32 %s11, 1
      // Predicated region
      $region13: #{build_layer_forward.3} parent=11 // pred_check
        %p176 = pneg %p70
      $region14: #{build_layer_forward.3} parent=11 // pred_check_branch
        %178 = sbr.rel (%p176) target = $region16
      $region15: #{build_layer_forward.3} parent=11 // pred_region
        _
      $region16: #{build_layer_forward.3} parent=11 // pred_fallthru
        _
      // Predicated region
      $region17: #{build_layer_forward.3} parent=11 // pred_check
        %p179 = pneg %p91
      $region18: #{build_layer_forward.3} parent=11 // pred_check_branch
        %181 = sbr.rel (%p179) target = $region20
      $region19: #{build_layer_forward.3} parent=11 // pred_region
        _
      $region20: #{build_layer_forward.3} parent=11 // pred_fallthru
        _
      // Predicated region
      $region21: #{build_layer_forward.3} parent=11 // pred_check
        %p182 = pneg %p112
      $region22: #{build_layer_forward.3} parent=11 // pred_check_branch
        %184 = sbr.rel (%p182) target = $region24
      $region23: #{build_layer_forward.3} parent=11 // pred_region
        _
      $region24: #{build_layer_forward.3} parent=11 // pred_fallthru
        _
      // Predicated region
      $region25: #{build_layer_forward.3} parent=11 // pred_check
        %p185 = pneg %p133
      $region26: #{build_layer_forward.3} parent=11 // pred_check_branch
        %187 = sbr.rel (%p185) target = $region28
      $region27: #{build_layer_forward.3} parent=11 // pred_region
        _
      $region28: #{build_layer_forward.3} parent=11 // pred_fallthru
        _
    $region12: #{build_layer_forward.3} parent=5 // pred_fallthru
      _
    %p188 = scmp.lt.s32.totalorder %s11, 2
    // Predicated region
    $region29: #{build_layer_forward.3} parent=5 // pred_check
      %p189 = pneg %p188
    $region30: #{build_layer_forward.3} parent=5 // pred_check_branch
      %191 = sbr.rel (%p189) target = $region32
    $region31: #{build_layer_forward.3} parent=5 // pred_region
      // Predicated region
      $region33: #{build_layer_forward.3} parent=31 // pred_check
        %p192 = pneg %p43
      $region34: #{build_layer_forward.3} parent=31 // pred_check_branch
        %194 = sbr.rel (%p192) target = $region36
      $region35: #{build_layer_forward.3} parent=31 // pred_region
        %p195 = scmp.lt.s32.totalorder %s18, 1
        %s196 = scalar_select %p195, %s18, 1
        %s197 = smul.addr %s196, 2
        %s198 = smul.addr %s197, 4
        %s199 = scalar_lea.vmem %s0, %s198
      $region36: #{build_layer_forward.3} parent=31 // pred_fallthru
        _
    $region32: #{build_layer_forward.3} parent=5 // pred_fallthru
      _
    %p200 = scmp.le.s32.totalorder 1, %s11
    %p201 = scmp.lt.s32.totalorder %s11, 3
    %p202 = pnand %p200, %p201
    %p203 = pneg %p202
    // Predicated region
    $region37: #{build_layer_forward.3} parent=5 // pred_check
      _
    $region38: #{build_layer_forward.3} parent=5 // pred_check_branch
      %205 = sbr.rel (%p202) target = $region40
    $region39: #{build_layer_forward.3} parent=5 // pred_region
      %s206 = ssub.s32 %s11, 1
      %p207 = scmp.lt.s32.totalorder %s20, 1
      %s208 = scalar_select %p207, %s20, 1
      %s209 = smul.addr %s208, 2
      %s210 = smul.addr %s209, 4
      %s211 = scalar_lea.vmem %s0, %s210
      %p212 = pneg %p49
      %p213 = pneg %p46
      %p214 = pneg %p70
      %p215 = pneg %p67
      %p216 = pneg %p91
      %p217 = pneg %p88
      %p218 = pneg %p112
      %p219 = pneg %p109
      %p220 = pneg %p133
      %p221 = pneg %p130
      %p222 = pneg %p161
      %p223 = pneg %p158
      %p224 = scmp.lt.s32.totalorder %s20, 1
      %s225 = scalar_select %p224, %s20, 1
      %p226 = scmp.lt.s32.totalorder %s21, 0
      %s227 = scalar_select %p226, %s21, 0
      %s228 = smul.addr %s225, 2
      %s229 = sadd.s32 %s227, %s228
      %s230 = smul.addr %s229, 8
      %s231 = scalar_lea.vmem %s5, %s230
      %p232 = scmp.lt.s32.totalorder %s20, 1
      %s233 = scalar_select %p232, %s20, 1
      %s234 = smul.addr %s233, 2
      %s235 = smul.addr %s234, 4
      %s236 = scalar_lea.vmem %s0, %s235
      %p237 = scmp.lt.s32.totalorder %s20, 1
      %s238 = scalar_select %p237, %s20, 1
      %p239 = scmp.lt.s32.totalorder %s21, 0
      %s240 = scalar_select %p239, %s21, 0
      %s241 = smul.addr %s238, 2
      %s242 = sadd.s32 %s240, %s241
      %s243 = smul.addr %s242, 8
      %s244 = scalar_lea.vmem %s5, %s243
      %s246 = smul.u32 %s21, 128
      %s247 = sshra.s32 %s246, 7
      %s248 = sand.u32 %s246, 127
      %s249 = smul.addr %s247, 4
      %s250 = scalar_lea.vmem %s236, %s249
      %v251 = vld [vmem:[%s250] sm:$0xff]
      %252 = vst [vmem:[#allocation2] sm:$0xf] %v251
      %254 = vrot.lane.b32.xlu0 %v251, 127
      %v255 = vpop.permute.xlu0 %254
      %v256 = vrot.slane %v255, 4
      %vm257 = vcmask 1039360
      %v258 = vsel %vm257, %v255, %v256
      %260 = vst [vmem:[#allocation2 + $0x4] sm:$0xf] %v258
      %261 = vrot.lane.b32.xlu0 %v251, 126
      %v262 = vpop.permute.xlu0 %261
      %v263 = vrot.slane %v262, 4
      %vm264 = vcmask 1031168
      %v265 = vsel %vm264, %v262, %v263
      %267 = vst [vmem:[#allocation2 + $0x8] sm:$0xf] %v265
      %268 = vrot.lane.b32.xlu0 %v251, 125
      %v269 = vpop.permute.xlu0 %268
      %v270 = vrot.slane %v269, 4
      %vm271 = vcmask 1022976
      %v272 = vsel %vm271, %v269, %v270
      %274 = vst [vmem:[#allocation2 + $0xc] sm:$0xf] %v272
      %275 = vrot.lane.b32.xlu0 %v251, 124
      %v276 = vpop.permute.xlu0 %275
      %v277 = vrot.slane %v276, 4
      %vm278 = vcmask 1014784
      %v279 = vsel %vm278, %v276, %v277
      %281 = vst [vmem:[#allocation2 + $0x10] sm:$0xf] %v279
      %v282 = vld [vmem:[%s1] sm:$0xf]
      %v283 = vld [vmem:[%s1 + $0x4] sm:$0xf]
      %v284 = vld [vmem:[#allocation2] sm:$0xf]
      %v285 = vld [vmem:[#allocation2 + $0x4] sm:$0xf]
      %v286 = vld [vmem:[#allocation2 + $0x8] sm:$0xf]
      %v287 = vld [vmem:[#allocation2 + $0xc] sm:$0xf]
      %v288 = vld [vmem:[#allocation2 + $0x10] sm:$0xf]
      %v289 = vld [vmem:[%s2] sm:$0xff]
      %v290 = vld [vmem:[%s2 + $0x8] sm:$0xff]
      %292 = vset.pattern.permute.xlu0 0
      %293 = vperm.xlu0 %292, %v289
      %v294 = vpop.permute.xlu0 %293
      %297 = vset.pattern.permute.xlu0 0
      %298 = vperm.xlu0 %297, %v290
      %v299 = vpop.permute.xlu0 %298
      %v303 = vunpack.c.l.b16 %v282
      %v304 = vunpack.c.l.b16 %v283
      %v305 = vpack.c.b16 %v304, %v303
      %v311 = vunpack.c.l.b16 %v284
      %v312 = vunpack.c.l.b16 %v285
      %v313 = vunpack.c.l.b16 %v286
      %v314 = vunpack.c.l.b16 %v287
      %v315 = vunpack.c.l.b16 %v288
      %v316 = vpack.c.b16 %v312, %v311
      %v317 = vpack.c.b16 %v314, %v313
      %v318 = vpack.c.b16 %v315, %v315
      %vm321 = vcmask 326656
      %v323 = vsel %vm321, %v305, 0
      %vm325 = vcmask 1043456
      %v327 = vsel %vm325, %v318, 0
      %329 = vmatprep.subr.bf16.mxu0 0
      %330 = vmatpush1.bf16.msra.mxu0 %v316
      %331 = vmatprep.subr.bf16.mxu0 0
      %332 = vmatpush1.bf16.msra.mxu0 %v317
      %333 = vmatprep.subr.bf16.mxu0 0
      %334 = vmatpush1.bf16.msra.mxu0 %v327
      %335 = vmatprep.subr.bf16.mxu0 0
      %336 = vmatpush1.bf16.msra.mxu0 0
      %337 = vmatprep.subr.bf16.mxu0 0
      %338 = vmatpush1.bf16.msra.mxu0 0
      %339 = vmatprep.subr.bf16.mxu0 0
      %340 = vmatpush1.bf16.msra.mxu0 0
      %341 = vmatprep.subr.bf16.mxu0 0
      %342 = vmatpush1.bf16.msra.mxu0 0
      %343 = vmatprep.subr.bf16.mxu0 0
      %344 = vmatpush1.bf16.msra.mxu0 0
      %345 = vmatprep.subr.bf16.mxu0 0
      %346 = vmatpush1.bf16.msra.mxu0 0
      %347 = vmatprep.subr.bf16.mxu0 0
      %348 = vmatpush1.bf16.msra.mxu0 0
      %349 = vmatprep.subr.bf16.mxu0 0
      %350 = vmatpush1.bf16.msra.mxu0 0
      %351 = vmatprep.subr.bf16.mxu0 0
      %352 = vmatpush1.bf16.msra.mxu0 0
      %353 = vmatprep.subr.bf16.mxu0 0
      %354 = vmatpush1.bf16.msra.mxu0 0
      %355 = vmatprep.subr.bf16.mxu0 0
      %356 = vmatpush1.bf16.msra.mxu0 0
      %357 = vmatprep.subr.bf16.mxu0 0
      %358 = vmatpush1.bf16.msra.mxu0 0
      %359 = vmatprep.subr.bf16.mxu0 0
      %360 = vmatpush1.bf16.msra.mxu0 0
      %361 = vmatprep.mubr.bf16.mxu0 0
      %362 = vmatmul.mubr.bf16.gmra.mrb[0].mxu0 %v323
      %v363 = vpop.f32.mrb[0].mxu0
      %v364 = vadd.f32 %v294, %v363
      %v365 = vpop.f32.mrb[0].mxu0
      %v366 = vpop.f32.mrb[0].mxu0
      %v367 = vadd.f32 %v299, %v366
      %v368 = vpop.f32.mrb[0].mxu0
      %369 = vdwg.mxu0
      %v370 = vld [vmem:[%s3] sm:$0xff]
      %v371 = vld [vmem:[%s3 + $0x8] sm:$0xff]
      %373 = vset.pattern.permute.xlu0 0
      %374 = vperm.xlu0 %373, %v370
      %v375 = vpop.permute.xlu0 %374
      %378 = vset.pattern.permute.xlu0 0
      %379 = vperm.xlu0 %378, %v371
      %v380 = vpop.permute.xlu0 %379
      %v382 = vmul.f32 %v364, %v375
      %v383 = vmul.f32 %v367, %v380
      %v384 = vld [vmem:[%s4] sm:$0xff]
      %v385 = vld [vmem:[%s4 + $0x8] sm:$0xff]
      %387 = vset.pattern.permute.xlu0 0
      %388 = vperm.xlu0 %387, %v384
      %v389 = vpop.permute.xlu0 %388
      %392 = vset.pattern.permute.xlu0 0
      %393 = vperm.xlu0 %392, %v385
      %v394 = vpop.permute.xlu0 %393
      %v396 = vadd.f32 %v382, %v389
      %v397 = vadd.f32 %v383, %v394
      %v398 = vmax.f32 %v396, 0.0
      %v399 = vmax.f32 %v397, 0.0
      %400 = vst [vmem:[%s244] sm:$0xff] %v398
      %401 = vst [vmem:[%s244 + $0x8] sm:$0xff] %v399
      %p402 = scmp.lt.s32.totalorder %s20, 1
      %s403 = scalar_select %p402, %s20, 1
      %p404 = scmp.lt.s32.totalorder %s21, 0
      %s405 = scalar_select %p404, %s21, 0
      %s406 = smul.addr %s403, 2
      %s407 = sadd.s32 %s405, %s406
      %s408 = smul.addr %s407, 8
      %s409 = scalar_lea.vmem %s5, %s408
      // Predicated region
      $region41: #{build_layer_forward.3} parent=39 // pred_check
        %p410 = pneg %p158
      $region42: #{build_layer_forward.3} parent=39 // pred_check_branch
        %412 = sbr.rel (%p410) target = $region44
      $region43: #{build_layer_forward.3} parent=39 // pred_region
        _
      $region44: #{build_layer_forward.3} parent=39 // pred_fallthru
        _
    $region40: #{build_layer_forward.3} parent=5 // pred_fallthru
      _
    %p413 = scmp.le.s32.totalorder 2, %s11
    // Predicated region
    $region45: #{build_layer_forward.3} parent=5 // pred_check
      %p414 = pneg %p413
    $region46: #{build_layer_forward.3} parent=5 // pred_check_branch
      %416 = sbr.rel (%p414) target = $region48
    $region47: #{build_layer_forward.3} parent=5 // pred_region
      %s417 = ssub.s32 %s11, 2
      // Predicated region
      $region49: #{build_layer_forward.3} parent=47 // pred_check
        %p418 = pneg %p164
      $region50: #{build_layer_forward.3} parent=47 // pred_check_branch
        %420 = sbr.rel (%p418) target = $region52
      $region51: #{build_layer_forward.3} parent=47 // pred_region
        %p421 = scmp.lt.s32.totalorder %s22, 1
        %s422 = scalar_select %p421, %s22, 1
        %p423 = scmp.lt.s32.totalorder %s23, 0
        %s424 = scalar_select %p423, %s23, 0
        %s425 = smul.addr %s422, 2
        %s426 = sadd.s32 %s424, %s425
        %s427 = smul.addr %s426, 8
        %s428 = scalar_lea.vmem %s5, %s427
      $region52: #{build_layer_forward.3} parent=47 // pred_fallthru
        _
    $region48: #{build_layer_forward.3} parent=5 // pred_fallthru
      _
  $region6: #{build_layer_forward.3} parent=0 // loop_footer
    %s15 = sadd.s32 1, %s11
  $region7: #{build_layer_forward.3} parent=0 // loop_footer_branch
    %10 = sbr.rel target = $region3
  $region8: #{build_layer_forward.3} parent=0 // loop_exit
    _

</llo_original>
